<compile_context>
chip_gen: v5e
topology: v5e:2x2
jax: 0.10.0
libtpu: 0.0.40
codegen_flags: <defaults>
</compile_context>

<pallas_src>
import functools

import jax
import jax.numpy as jnp
from jax.experimental import pallas as pl
from jax.experimental.pallas import tpu as pltpu


_MAX_TILE_C = 4096  # lane-aligned class chunk used when C is vocab-scale


def _vmem_config():
    """(vmem_budget_bytes for tiling, vmem_limit_bytes for the compiler)."""
    cap = None
    try:
        cap = getattr(pltpu.get_tpu_info(), "vmem_capacity_bytes", None)
    except Exception:
        cap = None
    if cap is None:
        cap = 64 * 1024 * 1024            # assume the smaller (v7x) VMEM
    if cap >= 96 * 1024 * 1024:           # v5e / v6e: 128 MiB physical
        return 44 * 1024 * 1024, 64 * 1024 * 1024
    return 20 * 1024 * 1024, 32 * 1024 * 1024   # v7x: 64 MiB per TensorCore


def _choose_tile_n(n, tile_c, in_bytes, vmem_budget_bytes,
                   target_step_bytes=4 * 1024 * 1024):
    """Largest multiple-of-8 row tile within the VMEM budget and stream target."""
    n_pad8 = max(8, ((n + 7) // 8) * 8)
    c_lanes = ((tile_c + 127) // 128) * 128
    # Per-row working set for one grid step:
    #   2x double-buffered logits chunk (input dtype)
    # + 2x double-buffered (lane-padded) label column
    # + ~3 (tile_n, c_lanes) f32 in-kernel temporaries
    # + 3 (tile_n, 128) f32 running-accumulator scratches.
    bytes_per_row = (2 * c_lanes * in_bytes
                     + 2 * 128 * 4
                     + 3 * c_lanes * 4
                     + 3 * 128 * 4)
    t_vmem = vmem_budget_bytes // bytes_per_row
    # ~4 MiB of logits per step keeps the fixed ~0.35 us step cost <1% of HBM time.
    t_stream = target_step_bytes // max(1, c_lanes * in_bytes)
    tile_n = max(8, min(t_vmem, t_stream, n_pad8))
    tile_n = max(8, (tile_n // 8) * 8)
    if n_pad8 >= 16:
        # Keep >= 2 row tiles so v7x's 2 TensorCores both get work on the
        # "parallel" grid axis.
        tile_n = min(tile_n, max(8, ((n_pad8 // 2) // 8) * 8))
    return tile_n


def _hard_bootstrap_kernel(labels_ref, logits_ref, out_ref,
                           m_sc, s_sc, xl_sc, *,
                           beta, n_total, c_total, tile_n, tile_c):
    i = pl.program_id(0)            # row-tile index      ("parallel")
    j = pl.program_id(1)            # class-chunk index   ("arbitrary", innermost)
    nj = pl.num_programs(1)

    @pl.when(j == 0)
    def _init():
        m_sc[...] = jnp.full((tile_n, 1), -jnp.inf, jnp.float32)
        s_sc[...] = jnp.zeros((tile_n, 1), jnp.float32)
        xl_sc[...] = jnp.zeros((tile_n, 1), jnp.float32)

    x = logits_ref[...].astype(jnp.float32)          # (tile_n, tile_c), f32 math
    labels = labels_ref[...]                          # (tile_n, 1) int32

    # Mask class columns that only exist because the last chunk is partial.
    col = j * tile_c + jax.lax.broadcasted_iota(jnp.int32, x.shape, 1)
    x_m = jnp.where(col < c_total, x, -jnp.inf)

    # Online (flash-softmax style) accumulation of max / sum-exp / x[label].
    m_old = m_sc[...]
    m_new = jnp.maximum(m_old, jnp.max(x_m, axis=-1, keepdims=True))
    s_sc[...] = (s_sc[...] * jnp.exp(m_old - m_new)
                 + jnp.sum(jnp.exp(x_m - m_new), axis=-1, keepdims=True))
    xl_sc[...] = xl_sc[...] + jnp.sum(jnp.where(col == labels, x, 0.0),
                                      axis=-1, keepdims=True)
    m_sc[...] = m_new

    @pl.when(j == nj - 1)
    def _finalize():
        m = m_sc[...]
        lse = m + jnp.log(s_sc[...])
        # beta*(lse - x_label) - (1-beta)*(m - lse) = lse - beta*x_label - (1-beta)*m
        loss = lse - beta * xl_sc[...] - (1.0 - beta) * m          # (tile_n, 1)
        # Mask rows that exist only because the last row block is partial.
        row = i * tile_n + jax.lax.broadcasted_iota(jnp.int32, (tile_n, 1), 0)
        loss = jnp.where(row < n_total, loss, 0.0)
        partial = jnp.sum(loss, keepdims=True)                      # (1, 1)
        out_ref[...] = jnp.broadcast_to(partial, (1, 128))


def hard_bootstrapping_loss(y_pred, y, beta=0.8, tile_n=None, tile_c=None):
    """Pallas implementation of HardBootstrappingLoss (reduce=True)."""
    n, c = y_pred.shape
    in_bytes = jnp.dtype(y_pred.dtype).itemsize
    vmem_budget, vmem_limit = _vmem_config()

    # Class-dim chunking (last block dim must be a multiple of 128 or == C).
    if tile_c is None:
        tile_c = c if c <= _MAX_TILE_C else _MAX_TILE_C
    tile_c = int(tile_c)
    assert tile_c == c or tile_c % 128 == 0, "tile_c must be C or a multiple of 128"
    num_c_tiles = -(-c // tile_c)

    if tile_n is None:
        tile_n = _choose_tile_n(n, tile_c, in_bytes, vmem_budget)
    tile_n = max(8, (int(tile_n) // 8) * 8)
    num_row_tiles = -(-n // tile_n)

    # Labels stay a thin (N, 1) int32 column: lane-padded in VMEM but never
    # pre-broadcast in HBM. Logits are streamed in their input dtype (bf16 ok).
    labels = y.astype(jnp.int32).reshape(n, 1)

    kernel = functools.partial(
        _hard_bootstrap_kernel, beta=float(beta), n_total=n, c_total=c,
        tile_n=tile_n, tile_c=tile_c)

    cost = pl.CostEstimate(
        flops=6 * n * c,
        transcendentals=n * c,
        bytes_accessed=n * c * in_bytes + n * 4 + num_row_tiles * 128 * 4,
    )

    out = pl.pallas_call(
        kernel,
        out_shape=jax.ShapeDtypeStruct((1, 128 * num_row_tiles), jnp.float32),
        grid_spec=pltpu.PrefetchScalarGridSpec(
            num_scalar_prefetch=0,
            grid=(num_row_tiles, num_c_tiles),
            in_specs=[
                pl.BlockSpec((tile_n, 1), lambda i, j: (i, 0)),        # labels
                pl.BlockSpec((tile_n, tile_c), lambda i, j: (i, j)),   # logits
            ],
            out_specs=pl.BlockSpec((1, 128), lambda i, j: (0, i)),
            scratch_shapes=[
                pltpu.VMEM((tile_n, 1), jnp.float32),   # running max m
                pltpu.VMEM((tile_n, 1), jnp.float32),   # running sum-exp
                pltpu.VMEM((tile_n, 1), jnp.float32),   # running x[label]
            ],
        ),
        compiler_params=pltpu.CompilerParams(
            dimension_semantics=("parallel", "arbitrary"),
            vmem_limit_bytes=vmem_limit,
        ),
        cost_estimate=cost,
    )(labels, y_pred)

    partials = out.reshape(num_row_tiles, 128)[:, 0]   # one f32 per row tile
    return jnp.sum(partials) / n                        # mean over the true N


def _reference_loss(y_pred, y, beta=0.8):
    logp = jax.nn.log_softmax(y_pred, axis=1)
    ce = -jnp.take_along_axis(logp, y[:, None], axis=1)[:, 0]
    z = jnp.argmax(y_pred, axis=1)
    boot = jnp.take_along_axis(logp, z[:, None], axis=1)[:, 0]
    return jnp.mean(beta * ce - (1.0 - beta) * boot)


if __name__ == "__main__":
    key = jax.random.PRNGKey(0)
    k1, k2, k3, k4 = jax.random.split(key, 4)

    # Case 1: f32 logits; N not a multiple of the row tile (exercises edge masking).
    N1, C1 = 13, 32
    yp1 = jax.random.normal(k1, (N1, C1), dtype=jnp.float32)
    y1 = jax.random.randint(k2, (N1,), 0, C1, dtype=jnp.int32)
    out1 = jax.block_until_ready(hard_bootstrapping_loss(yp1, y1, beta=0.8))
    ref1 = jax.block_until_ready(_reference_loss(yp1, y1, beta=0.8))
    assert jnp.allclose(out1, ref1, atol=1e-5, rtol=1e-5), (out1, ref1)

    # Case 2: bf16 logits streamed directly + forced class-dim chunking
    # (exercises the online-softmax accumulation across class chunks).
    N2, C2 = 16, 256
    yp2 = jax.random.normal(k3, (N2, C2), dtype=jnp.float32).astype(jnp.bfloat16)
    y2 = jax.random.randint(k4, (N2,), 0, C2, dtype=jnp.int32)
    out2 = jax.block_until_ready(
        hard_bootstrapping_loss(yp2, y2, beta=0.8, tile_c=128))
    ref2 = jax.block_until_ready(
        _reference_loss(yp2.astype(jnp.float32), y2, beta=0.8))
    assert jnp.allclose(out2, ref2, atol=1e-4, rtol=1e-4), (out2, ref2)

    print("KERNEL_OK")
</pallas_src>

<mosaic_0001>
module attributes {stable_mosaic.version = 11 : i64} {
  func.func @_hard_bootstrap_kernel(%arg0: i32, %arg1: i32, %arg2: memref<8x1xi32, #tpu.memory_space<vmem>>, %arg3: memref<8x32xf32, #tpu.memory_space<vmem>>, %arg4: memref<1x128xf32, #tpu.memory_space<vmem>>, %arg5: memref<8x1xf32, #tpu.memory_space<vmem>>, %arg6: memref<8x1xf32, #tpu.memory_space<vmem>>, %arg7: memref<8x1xf32, #tpu.memory_space<vmem>>) attributes {dimension_semantics = [#tpu.dimension_semantics<parallel>, #tpu.dimension_semantics<arbitrary>], iteration_bounds = array<i64: 2, 1>, scalar_prefetch = 0 : i64, scratch_operands = 3 : i64, tpu.core_type = #tpu.core_type<tc>, window_params = [{transform_indices = @transform_0, window_bounds = array<i64: 8, 1>}, {transform_indices = @transform_1, window_bounds = array<i64: 8, 32>}, {transform_indices = @transform_2, window_bounds = array<i64: 1, 128>}]} {
    %c0_i32 = arith.constant 0 : i32
    %0 = arith.cmpi eq, %arg1, %c0_i32 : i32
    %1 = arith.extui %0 : i1 to i32
    %c0_i32_0 = arith.constant 0 : i32
    %2 = arith.cmpi ne, %1, %c0_i32_0 : i32
    scf.if %2 {
      %cst_23 = arith.constant 0xFF800000 : f32
      %41 = vector.broadcast %cst_23 : f32 to vector<8x1xf32>
      %c0_24 = arith.constant 0 : index
      %c0_25 = arith.constant 0 : index
      %42 = vector.load %arg5[%c0_24, %c0_25] : memref<8x1xf32, #tpu.memory_space<vmem>>, vector<8x1xf32>
      tpu.vector_store %arg5[%c0_24, %c0_25], %41 {strides = array<i32>} : memref<8x1xf32, #tpu.memory_space<vmem>>, vector<8x1xf32>,
      %cst_26 = arith.constant 0.000000e+00 : f32
      %43 = vector.broadcast %cst_26 : f32 to vector<8x1xf32>
      %c0_27 = arith.constant 0 : index
      %c0_28 = arith.constant 0 : index
      %44 = vector.load %arg6[%c0_27, %c0_28] : memref<8x1xf32, #tpu.memory_space<vmem>>, vector<8x1xf32>
      tpu.vector_store %arg6[%c0_27, %c0_28], %43 {strides = array<i32>} : memref<8x1xf32, #tpu.memory_space<vmem>>, vector<8x1xf32>,
      %cst_29 = arith.constant 0.000000e+00 : f32
      %45 = vector.broadcast %cst_29 : f32 to vector<8x1xf32>
      %c0_30 = arith.constant 0 : index
      %c0_31 = arith.constant 0 : index
      %46 = vector.load %arg7[%c0_30, %c0_31] : memref<8x1xf32, #tpu.memory_space<vmem>>, vector<8x1xf32>
      tpu.vector_store %arg7[%c0_30, %c0_31], %45 {strides = array<i32>} : memref<8x1xf32, #tpu.memory_space<vmem>>, vector<8x1xf32>,
    } else {
    }
    %c0 = arith.constant 0 : index
    %c0_1 = arith.constant 0 : index
    %3 = vector.load %arg3[%c0, %c0_1] : memref<8x32xf32, #tpu.memory_space<vmem>>, vector<8x32xf32>
    %c0_2 = arith.constant 0 : index
    %c0_3 = arith.constant 0 : index
    %4 = vector.load %arg2[%c0_2, %c0_3] : memref<8x1xi32, #tpu.memory_space<vmem>>, vector<8x1xi32>
    %c32_i32 = arith.constant 32 : i32
    %5 = arith.muli %arg1, %c32_i32 : i32
    %6 = tpu.iota {dimensions = array<i32: 1>} : vector<8x32xi32>
    %7 = vector.broadcast %5 : i32 to vector<8x32xi32>
    %8 = arith.addi %7, %6 : vector<8x32xi32>
    %c32_i32_4 = arith.constant 32 : i32
    %9 = vector.broadcast %c32_i32_4 : i32 to vector<8x32xi32>
    %10 = arith.cmpi slt, %8, %9 : vector<8x32xi32>
    %cst = arith.constant 0xFF800000 : f32
    %11 = vector.broadcast %cst : f32 to vector<8x32xf32>
    %12 = arith.select %10, %3, %11 : vector<8x32xi1>, vector<8x32xf32>
    %c0_5 = arith.constant 0 : index
    %c0_6 = arith.constant 0 : index
    %13 = vector.load %arg5[%c0_5, %c0_6] : memref<8x1xf32, #tpu.memory_space<vmem>>, vector<8x1xf32>
    %cst_7 = arith.constant dense<0xFF800000> : vector<8xf32>
    %14 = vector.multi_reduction <maximumf>, %12, %cst_7 [1] : vector<8x32xf32> to vector<8xf32>
    %15 = vector.shape_cast %14 : vector<8xf32> to vector<8x1xf32>
    %16 = arith.maximumf %13, %15 : vector<8x1xf32>
    %c0_8 = arith.constant 0 : index
    %c0_9 = arith.constant 0 : index
    %17 = vector.load %arg6[%c0_8, %c0_9] : memref<8x1xf32, #tpu.memory_space<vmem>>, vector<8x1xf32>
    %18 = arith.subf %13, %16 : vector<8x1xf32>
    %19 = math.exp %18 : vector<8x1xf32>
    %20 = arith.mulf %17, %19 : vector<8x1xf32>
    %21 = vector.broadcast %16 : vector<8x1xf32> to vector<8x32xf32>
    %22 = arith.subf %12, %21 : vector<8x32xf32>
    %23 = math.exp %22 : vector<8x32xf32>
    %cst_10 = arith.constant dense<0.000000e+00> : vector<8xf32>
    %24 = vector.multi_reduction <add>, %23, %cst_10 [1] : vector<8x32xf32> to vector<8xf32>
    %25 = vector.shape_cast %24 : vector<8xf32> to vector<8x1xf32>
    %26 = arith.addf %20, %25 : vector<8x1xf32>
    %c0_11 = arith.constant 0 : index
    %c0_12 = arith.constant 0 : index
    %27 = vector.load %arg6[%c0_11, %c0_12] : memref<8x1xf32, #tpu.memory_space<vmem>>, vector<8x1xf32>
    tpu.vector_store %arg6[%c0_11, %c0_12], %26 {strides = array<i32>} : memref<8x1xf32, #tpu.memory_space<vmem>>, vector<8x1xf32>,
    %c0_13 = arith.constant 0 : index
    %c0_14 = arith.constant 0 : index
    %28 = vector.load %arg7[%c0_13, %c0_14] : memref<8x1xf32, #tpu.memory_space<vmem>>, vector<8x1xf32>
    %29 = vector.broadcast %4 : vector<8x1xi32> to vector<8x32xi32>
    %30 = arith.cmpi eq, %8, %29 : vector<8x32xi32>
    %cst_15 = arith.constant 0.000000e+00 : f32
    %31 = vector.broadcast %cst_15 : f32 to vector<8x32xf32>
    %32 = arith.select %30, %3, %31 : vector<8x32xi1>, vector<8x32xf32>
    %cst_16 = arith.constant dense<0.000000e+00> : vector<8xf32>
    %33 = vector.multi_reduction <add>, %32, %cst_16 [1] : vector<8x32xf32> to vector<8xf32>
    %34 = vector.shape_cast %33 : vector<8xf32> to vector<8x1xf32>
    %35 = arith.addf %28, %34 : vector<8x1xf32>
    %c0_17 = arith.constant 0 : index
    %c0_18 = arith.constant 0 : index
    %36 = vector.load %arg7[%c0_17, %c0_18] : memref<8x1xf32, #tpu.memory_space<vmem>>, vector<8x1xf32>
    tpu.vector_store %arg7[%c0_17, %c0_18], %35 {strides = array<i32>} : memref<8x1xf32, #tpu.memory_space<vmem>>, vector<8x1xf32>,
    %c0_19 = arith.constant 0 : index
    %c0_20 = arith.constant 0 : index
    %37 = vector.load %arg5[%c0_19, %c0_20] : memref<8x1xf32, #tpu.memory_space<vmem>>, vector<8x1xf32>
    tpu.vector_store %arg5[%c0_19, %c0_20], %16 {strides = array<i32>} : memref<8x1xf32, #tpu.memory_space<vmem>>, vector<8x1xf32>,
    %c0_i32_21 = arith.constant 0 : i32
    %38 = arith.cmpi eq, %arg1, %c0_i32_21 : i32
    %39 = arith.extui %38 : i1 to i32
    %c0_i32_22 = arith.constant 0 : i32
    %40 = arith.cmpi ne, %39, %c0_i32_22 : i32
    scf.if %40 {
      %c0_23 = arith.constant 0 : index
      %c0_24 = arith.constant 0 : index
      %41 = vector.load %arg5[%c0_23, %c0_24] : memref<8x1xf32, #tpu.memory_space<vmem>>, vector<8x1xf32>
      %c0_25 = arith.constant 0 : index
      %c0_26 = arith.constant 0 : index
      %42 = vector.load %arg6[%c0_25, %c0_26] : memref<8x1xf32, #tpu.memory_space<vmem>>, vector<8x1xf32>
      %43 = math.log %42 : vector<8x1xf32>
      %44 = arith.addf %41, %43 : vector<8x1xf32>
      %c0_27 = arith.constant 0 : index
      %c0_28 = arith.constant 0 : index
      %45 = vector.load %arg7[%c0_27, %c0_28] : memref<8x1xf32, #tpu.memory_space<vmem>>, vector<8x1xf32>
      %cst_29 = arith.constant 8.000000e-01 : f32
      %46 = vector.broadcast %cst_29 : f32 to vector<8x1xf32>
      %47 = arith.mulf %46, %45 : vector<8x1xf32>
      %48 = arith.subf %44, %47 : vector<8x1xf32>
      %cst_30 = arith.constant 2.000000e-01 : f32
      %49 = vector.broadcast %cst_30 : f32 to vector<8x1xf32>
      %50 = arith.mulf %49, %41 : vector<8x1xf32>
      %51 = arith.subf %48, %50 : vector<8x1xf32>
      %c8_i32 = arith.constant 8 : i32
      %52 = arith.muli %arg0, %c8_i32 : i32
      %53 = tpu.iota {dimensions = array<i32: 0>} : vector<8x1xi32>
      %54 = vector.broadcast %52 : i32 to vector<8x1xi32>
      %55 = arith.addi %54, %53 : vector<8x1xi32>
      %c13_i32 = arith.constant 13 : i32
      %56 = vector.broadcast %c13_i32 : i32 to vector<8x1xi32>
      %57 = arith.cmpi slt, %55, %56 : vector<8x1xi32>
      %cst_31 = arith.constant 0.000000e+00 : f32
      %58 = vector.broadcast %cst_31 : f32 to vector<8x1xf32>
      %59 = arith.select %57, %51, %58 : vector<8x1xi1>, vector<8x1xf32>
      %60 = vector.shape_cast %59 : vector<8x1xf32> to vector<1x8x1xf32>
      %cst_32 = arith.constant dense<0.000000e+00> : vector<1xf32>
      %61 = vector.multi_reduction <add>, %60, %cst_32 [1, 2] : vector<1x8x1xf32> to vector<1xf32>
      %62 = vector.shape_cast %61 : vector<1xf32> to vector<1x1x1xf32>
      %63 = vector.extract %62[0, 0, 0] : f32 from vector<1x1x1xf32>
      %64 = vector.broadcast %63 : f32 to vector<1x1xf32>
      %65 = vector.shape_cast %64 : vector<1x1xf32> to vector<1x1xf32>
      %66 = vector.broadcast %65 : vector<1x1xf32> to vector<1x128xf32>
      %c0_33 = arith.constant 0 : index
      %c0_34 = arith.constant 0 : index
      %67 = vector.load %arg4[%c0_33, %c0_34] : memref<1x128xf32, #tpu.memory_space<vmem>>, vector<1x128xf32>
      tpu.vector_store %arg4[%c0_33, %c0_34], %66 {strides = array<i32>} : memref<1x128xf32, #tpu.memory_space<vmem>>, vector<1x128xf32>,
    } else {
    }
    return
  }
  func.func @transform_0(%arg0: i32, %arg1: i32) -> (i32, i32) {
    %c0_i32 = arith.constant 0 : i32
    %c0_i32_0 = arith.constant 0 : i32
    return %arg0, %c0_i32 : i32, i32
  }
  func.func @transform_1(%arg0: i32, %arg1: i32) -> (i32, i32) {
    %c0_i32 = arith.constant 0 : i32
    return %arg0, %arg1 : i32, i32
  }
  func.func @transform_2(%arg0: i32, %arg1: i32) -> (i32, i32) {
    %c0_i32 = arith.constant 0 : i32
    %c0_i32_0 = arith.constant 0 : i32
    return %c0_i32, %arg0 : i32, i32
  }
}

</mosaic_0001>

<llo_original>
// kernel: tpu_custom_call.1
$region0: #{tpu_custom_call.1}
  #allocation0 [shape = 'u32[]', space=smem, size = 0x4, offset = 0x4, fixed_abs, tag = 'smem constant byte address 0x4 - core index']
  #allocation1 [shape = 'u32[72,128]{1,0:T(1,128)}', space=vmem, size = 0x9000, scoped, tag = 'internal scratch']
  #allocation2 [shape = 'f32[8,1]{1,0:T(8,128)}', space=vmem, size = 0x1000, scoped, tag = 'scratch operand']
  #allocation3 [shape = 'f32[8,1]{1,0:T(8,128)}', space=vmem, size = 0x1000, scoped, tag = 'scratch operand']
  #allocation4 [shape = 'f32[8,1]{1,0:T(8,128)}', space=vmem, size = 0x1000, scoped, tag = 'scratch operand']
  %s0 = inlined_call_operand.vmem [shape: s32[13,1], index: 0, kind: input, shape index: {}]
  %s1 = inlined_call_operand.vmem [shape: f32[13,32], index: 1, kind: input, shape index: {}]
  %s2 = inlined_call_operand.hbm [shape: f32[1,256], index: 2, kind: output, shape index: {}]
  %s3 = sld [smem:[#allocation0]]
  $region49: #{tpu_custom_call.1} parent=0
    _
  %s5 = ssub.s32 1, %s3
  %s6 = scalar_select 0, %s5, %s3
  $region1: #{tpu_custom_call.1} parent=0
    #allocation5 [shape = 'u8[1024]{0}', space=vmem, size = 0x400, scoped, tag = 'output window, operand 0']
    #allocation6 [shape = 's32[2]{0}', space=sflag, size = 0x8, scoped, tag = 'scoped memory for tpu_custom_call.1']
    %7 = vsyncpa [#allocation6], 0
    %s8 = scalar_lea.sflag [#allocation6], 1
    %9 = vsyncpa %s8, 0
    loop: start=0, step=1, limit=4
    $region2: #{tpu_custom_call.1} parent=1 // loop_pre_header
      _
    $region3: #{tpu_custom_call.1} parent=1 // loop_header
      %s11 = sphi 0, %s15
      %p12 = scmp.ge.s32.totalorder %s11, 4
      %s18 = sphi 0, %s30
      %s19 = sphi 0, %s26
      %s20 = sphi 0, %s18
      %s21 = sphi 0, %s19
      %s22 = sphi 0, %s20
      %s23 = sphi 0, %s21
      %s33 = sphi 0, %s35
      %s36 = sphi 0, %s33
      %s37 = sphi 0, %s36
      %s53 = sphi 0, %s37
      %s61 = sphi 0, %s63
      %s64 = sphi 0, %s61
      %s65 = sphi 0, %s64
      %s81 = sphi 0, %s65
      %s87 = sphi 0, %s89
      %s90 = sphi 0, %s87
      %s91 = sphi 0, %s90
      %s107 = sphi 0, %s91
    $region4: #{tpu_custom_call.1} parent=1 // loop_header_branch
      %14 = sbr.rel (%p12) target = $region8
    $region5: #{tpu_custom_call.1} parent=1 // loop_body
      %s16 = ssub.s32 %s11, 1
      %s17 = ssub.s32 %s11, 2
      %s24 = sadd.s32 1, %s19
      %p25 = scmp.ge.s32.totalorder %s24, 1
      %s26 = scalar_select %p25, 0, %s24
      %s27 = sadd.s32 1, %s18
      %s28 = scalar_select %p25, %s27, %s18
      %p29 = scmp.ge.s32.totalorder %s28, 2
      %s30 = scalar_select %p29, 0, %s28
      %s31 = ssub.s32 %s18, %s30
      %p32 = scmp.eq.s32.totalorder %s31, 0
      %s34 = sadd.s32 %s33, 1
      %s35 = scalar_select %p32, %s33, %s34
      %p38 = pneg %p32
      %p39 = scmp.eq.s32.totalorder %s11, 1
      %p40 = por %p38, %p39
      %p41 = scmp.ne.s32.totalorder %s33, %s36
      %p42 = scmp.eq.s32.totalorder %s11, 0
      %p43 = por %p41, %p42
      %p44 = scmp.ne.s32.totalorder %s33, %s36
      %p45 = scmp.eq.s32.totalorder %s16, 1
      %p46 = por %p44, %p45
      %p47 = scmp.ne.s32.totalorder %s36, %s37
      %p48 = scmp.eq.s32.totalorder %s16, 0
      %p49 = por %p47, %p48
      %p50 = scmp.ne.s32.totalorder %s36, %s37
      %p51 = scmp.eq.s32.totalorder %s17, 1
      %p52 = por %p50, %p51
      %p54 = scmp.ne.s32.totalorder %s37, %s53
      %p55 = scmp.eq.s32.totalorder %s17, 0
      %p56 = por %p54, %p55
      %s57 = ssub.s32 %s18, %s30
      %s58 = ssub.s32 %s19, %s26
      %s59 = sor.u32 %s57, %s58
      %p60 = scmp.eq.s32.totalorder %s59, 0
      %s62 = sadd.s32 %s61, 1
      %s63 = scalar_select %p60, %s61, %s62
      %p66 = pneg %p60
      %p67 = scmp.eq.s32.totalorder %s11, 1
      %p68 = por %p66, %p67
      %p69 = scmp.ne.s32.totalorder %s61, %s64
      %p70 = scmp.eq.s32.totalorder %s11, 0
      %p71 = por %p69, %p70
      %p72 = scmp.ne.s32.totalorder %s61, %s64
      %p73 = scmp.eq.s32.totalorder %s16, 1
      %p74 = por %p72, %p73
      %p75 = scmp.ne.s32.totalorder %s64, %s65
      %p76 = scmp.eq.s32.totalorder %s16, 0
      %p77 = por %p75, %p76
      %p78 = scmp.ne.s32.totalorder %s64, %s65
      %p79 = scmp.eq.s32.totalorder %s17, 1
      %p80 = por %p78, %p79
      %p82 = scmp.ne.s32.totalorder %s65, %s81
      %p83 = scmp.eq.s32.totalorder %s17, 0
      %p84 = por %p82, %p83
      %s85 = ssub.s32 %s18, %s30
      %p86 = scmp.eq.s32.totalorder %s85, 0
      %s88 = sadd.s32 %s87, 1
      %s89 = scalar_select %p86, %s87, %s88
      %p92 = pneg %p86
      %p93 = scmp.eq.s32.totalorder %s11, 1
      %p94 = por %p92, %p93
      %p95 = scmp.ne.s32.totalorder %s87, %s90
      %p96 = scmp.eq.s32.totalorder %s11, 0
      %p97 = por %p95, %p96
      %p98 = scmp.ne.s32.totalorder %s87, %s90
      %p99 = scmp.eq.s32.totalorder %s16, 1
      %p100 = por %p98, %p99
      %p101 = scmp.ne.s32.totalorder %s90, %s91
      %p102 = scmp.eq.s32.totalorder %s16, 0
      %p103 = por %p101, %p102
      %p104 = scmp.ne.s32.totalorder %s90, %s91
      %p105 = scmp.eq.s32.totalorder %s17, 1
      %p106 = por %p104, %p105
      %p108 = scmp.ne.s32.totalorder %s91, %s107
      %p109 = scmp.eq.s32.totalorder %s17, 0
      %p110 = por %p108, %p109
      %p111 = scmp.le.s32.totalorder 1, %s11
      %p112 = scmp.lt.s32.totalorder %s11, 3
      %p113 = pnand %p111, %p112
      %p114 = pneg %p113
      // Predicated region
      $region9: #{tpu_custom_call.1} parent=5 // pred_check
        _
      $region10: #{tpu_custom_call.1} parent=5 // pred_check_branch
        %116 = sbr.rel (%p113) target = $region12
      $region11: #{tpu_custom_call.1} parent=5 // pred_region
        %s117 = ssub.s32 %s11, 1
      $region12: #{tpu_custom_call.1} parent=5 // pred_fallthru
        _
      %p118 = scmp.lt.s32.totalorder %s11, 2
      // Predicated region
      $region13: #{tpu_custom_call.1} parent=5 // pred_check
        %p119 = pneg %p118
      $region14: #{tpu_custom_call.1} parent=5 // pred_check_branch
        %121 = sbr.rel (%p119) target = $region16
      $region15: #{tpu_custom_call.1} parent=5 // pred_region
        // Predicated region
        $region17: #{tpu_custom_call.1} parent=15 // pred_check
          %p122 = pneg %p43
        $region18: #{tpu_custom_call.1} parent=15 // pred_check_branch
          %124 = sbr.rel (%p122) target = $region20
        $region19: #{tpu_custom_call.1} parent=15 // pred_region
          %p125 = scmp.lt.s32.totalorder %s18, 1
          %s126 = scalar_select %p125, %s18, 1
          %s127 = smul.addr %s126, 8
          %s128 = scalar_lea.vmem %s0, %s127
        $region20: #{tpu_custom_call.1} parent=15 // pred_fallthru
          _
        // Predicated region
        $region21: #{tpu_custom_call.1} parent=15 // pred_check
          %p129 = pneg %p71
        $region22: #{tpu_custom_call.1} parent=15 // pred_check_branch
          %131 = sbr.rel (%p129) target = $region24
        $region23: #{tpu_custom_call.1} parent=15 // pred_region
          %p132 = scmp.lt.s32.totalorder %s18, 1
          %s133 = scalar_select %p132, %s18, 1
          %p134 = scmp.lt.s32.totalorder %s19, 0
          %s135 = scalar_select %p134, %s19, 0
          %s136 = sadd.s32 %s135, %s133
          %s137 = smul.addr %s136, 8
          %s138 = scalar_lea.vmem %s1, %s137
        $region24: #{tpu_custom_call.1} parent=15 // pred_fallthru
          _
      $region16: #{tpu_custom_call.1} parent=5 // pred_fallthru
        _
      %p139 = scmp.le.s32.totalorder 1, %s11
      %p140 = scmp.lt.s32.totalorder %s11, 3
      %p141 = pnand %p139, %p140
      %p142 = pneg %p141
      // Predicated region
      $region25: #{tpu_custom_call.1} parent=5 // pred_check
        _
      $region26: #{tpu_custom_call.1} parent=5 // pred_check_branch
        %144 = sbr.rel (%p141) target = $region28
      $region27: #{tpu_custom_call.1} parent=5 // pred_region
        %s145 = ssub.s32 %s11, 1
        %p146 = scmp.lt.s32.totalorder %s20, 1
        %s147 = scalar_select %p146, %s20, 1
        %s148 = smul.addr %s147, 8
        %s149 = scalar_lea.vmem %s0, %s148
        %p150 = pneg %p49
        %p151 = pneg %p46
        %p152 = scmp.lt.s32.totalorder %s20, 1
        %s153 = scalar_select %p152, %s20, 1
        %p154 = scmp.lt.s32.totalorder %s21, 0
        %s155 = scalar_select %p154, %s21, 0
        %s156 = sadd.s32 %s155, %s153
        %s157 = smul.addr %s156, 8
        %s158 = scalar_lea.vmem %s1, %s157
        %p159 = pneg %p77
        %p160 = pneg %p74
        %p161 = pneg %p103
        %p162 = pneg %p100
        %s163 = sand.u32 %s90, 1
        %s164 = scalar_lea.sflag [#allocation6], %s163
        %s165 = sand.u32 %s90, 1
        %s166 = scalar_lea.vmem [#allocation5], %s165
        %p167 = scmp.lt.s32.totalorder %s20, 1
        %s168 = scalar_select %p167, %s20, 1
        %s169 = smul.addr %s168, 8
        %s170 = scalar_lea.vmem %s0, %s169
        %p171 = scmp.lt.s32.totalorder %s20, 1
        %s172 = scalar_select %p171, %s20, 1
        %p173 = scmp.lt.s32.totalorder %s21, 0
        %s174 = scalar_select %p173, %s21, 0
        %s175 = sadd.s32 %s174, %s172
        %s176 = smul.addr %s175, 8
        %s177 = scalar_lea.vmem %s1, %s176
        %p178 = scmp.eq.s32.totalorder %s21, 0
        // Predicated region
        $region29: #{tpu_custom_call.1} parent=27 // pred_check
          %p179 = pneg %p178
        $region30: #{tpu_custom_call.1} parent=27 // pred_check_branch
          %181 = sbr.rel (%p179) target = $region32
        $region31: #{tpu_custom_call.1} parent=27 // pred_region
          %vm182 = vcmask 7168
          %183 = vst.msk [vmem:[#allocation2] sm:$0xff] %vm182, -inf
          %184 = vst.msk [vmem:[#allocation3] sm:$0xff] %vm182, 0.0
          %185 = vst.msk [vmem:[#allocation4] sm:$0xff] %vm182, 0.0
        $region32: #{tpu_custom_call.1} parent=27 // pred_fallthru
          _
        %v186 = vld [vmem:[%s177] sm:$0xff]
        %v187 = vld [vmem:[%s170] sm:$0xff]
        %s188 = smul.u32 %s21, 32
        %v189 = vlaneseq
        %v190 = vand.u32 %v189, 127
        %v191 = vstv %s188
        %v192 = vadd.s32 %v191, %v190
        %vm193 = vcmp.lt.s32.totalorder %v192, 32
        %v194 = vsel %vm193, %v186, -inf
        %v195 = vld [vmem:[#allocation2] sm:$0xff]
        %vm196 = vcmask 261120
        %v197 = vsel %vm196, %v194, -inf
        %198 = vmax.xlane.f32.xlu0 %v197
        %v199 = vpop.xlane.xlu0 %198
        %v200 = vmax.f32 %v195, %v199
        %v201 = vld [vmem:[#allocation3] sm:$0xff]
        %v202 = vsub.f32 %v195, %v200
        %v203 = vmul.f32 %v202, 1.442695
        %v204 = vpow.pop %v203
        %v205 = vmul.f32 %v201, %v204
        %207 = vset.pattern.permute.xlu0 0
        %208 = vperm.xlu0 %207, %v200
        %v209 = vpop.permute.xlu0 %208
        %v211 = vsub.f32 %v194, %v209
        %v212 = vmul.f32 %v211, 1.442695
        %v213 = vpow.pop %v212
        %v214 = vsel %vm196, %v213, 0.0
        %215 = vadd.xlane.f32.xlu0 %v214
        %v216 = vpop.xlane.xlu0 %215
        %v217 = vadd.f32 %v205, %v216
        %vm218 = vcmask 7168
        %219 = vst.msk [vmem:[#allocation3] sm:$0xff] %vm218, %v217
        %v220 = vld [vmem:[#allocation4] sm:$0xff]
        %221 = vset.pattern.permute.xlu0 0
        %222 = vperm.xlu0 %221, %v187
        %v223 = vpop.permute.xlu0 %222
        %vm224 = vcmp.eq.s32.totalorder %v192, %v223
        %v225 = vsel %vm224, %v186, 0.0
        %v226 = vsel %vm196, %v225, 0.0
        %227 = vadd.xlane.f32.xlu0 %v226
        %v228 = vpop.xlane.xlu0 %227
        %v229 = vadd.f32 %v220, %v228
        %230 = vst.msk [vmem:[#allocation4] sm:$0xff] %vm218, %v229
        %231 = vst.msk [vmem:[#allocation2] sm:$0xff] %vm218, %v200
        // Predicated region
        $region33: #{tpu_custom_call.1} parent=27 // pred_check
          %p232 = pneg %p178
        $region34: #{tpu_custom_call.1} parent=27 // pred_check_branch
          %234 = sbr.rel (%p232) target = $region36
        $region35: #{tpu_custom_call.1} parent=27 // pred_region
          %v235 = vld [vmem:[#allocation2] sm:$0xff]
          %v236 = vld [vmem:[#allocation3] sm:$0xff]
          %v237 = vlog2.pop %v236
          %v238 = vmul.f32 %v237, 0.6931472
          %v239 = vadd.f32 %v235, %v238
          %v240 = vld [vmem:[#allocation4] sm:$0xff]
          %v241 = vmul.f32 %v240, 0.8
          %v242 = vsub.f32 %v239, %v241
          %v243 = vmul.f32 %v235, 0.2
          %v244 = vsub.f32 %v242, %v243
          %s245 = smul.u32 %s20, 8
          %v246 = vlaneseq
          %v247 = vshrl.u32 %v246, 7
          %v248 = vstv %s245
          %v249 = vadd.s32 %v248, %v247
          %vm250 = vcmp.lt.s32.totalorder %v249, 13
          %v251 = vsel %vm250, %v244, 0.0
          %v252 = vsel %vm218, %v251, 0.0
          %253 = vadd.xlane.f32.xlu0 %v252
          %v254 = vpop.xlane.xlu0 %253
          %v255 = vrot.slane %v254, 4
          %v256 = vadd.f32 %v254, %v255
          %v257 = vrot.slane %v256, 2
          %v258 = vadd.f32 %v256, %v257
          %v259 = vrot.slane %v258, 1
          %v260 = vadd.f32 %v258, %v259
          %s261 = vtos %v260
          %v262 = vstv %s261
          %263 = vst [vmem:[%s166] sm:$0x1] %v262
        $region36: #{tpu_custom_call.1} parent=27 // pred_fallthru
          _
        %s264 = sand.u32 %s90, 1
        %s265 = scalar_lea.sflag [#allocation6], %s264
        %s266 = sand.u32 %s90, 1
        %s267 = scalar_lea.vmem [#allocation5], %s266
        // Predicated region
        $region37: #{tpu_custom_call.1} parent=27 // pred_check
          %p268 = pneg %p100
        $region38: #{tpu_custom_call.1} parent=27 // pred_check_branch
          %270 = sbr.rel (%p268) target = $region40
        $region39: #{tpu_custom_call.1} parent=27 // pred_region
          %272 = vsyncadd %s265, 0
          %s273 = scalar_lea.hbm %s2, %s20
          %s275 = sshll.u32 %s267, 4
          %s276 = int_to_ptr.vmem [resolvable:$true] %s275
          %s277 = sshll.u32 %s273, 4
          %s278 = int_to_ptr.hbm [resolvable:$true] %s277
          %280 = dma.vmem_to_hbm [thread:$0]  %s276, 16, %s278, %s265
        $region40: #{tpu_custom_call.1} parent=27 // pred_fallthru
          _
      $region28: #{tpu_custom_call.1} parent=5 // pred_fallthru
        _
      %p281 = scmp.le.s32.totalorder 2, %s11
      // Predicated region
      $region41: #{tpu_custom_call.1} parent=5 // pred_check
        %p282 = pneg %p281
      $region42: #{tpu_custom_call.1} parent=5 // pred_check_branch
        %284 = sbr.rel (%p282) target = $region44
      $region43: #{tpu_custom_call.1} parent=5 // pred_region
        %s285 = ssub.s32 %s11, 2
        // Predicated region
        $region45: #{tpu_custom_call.1} parent=43 // pred_check
          %p286 = pneg %p106
        $region46: #{tpu_custom_call.1} parent=43 // pred_check_branch
          %288 = sbr.rel (%p286) target = $region48
        $region47: #{tpu_custom_call.1} parent=43 // pred_region
          %s289 = sand.u32 %s91, 1
          %s290 = scalar_lea.sflag [#allocation6], %s289
          %s291 = sand.u32 %s91, 1
          %s292 = scalar_lea.vmem [#allocation5], %s291
          %294 = dma.done %s290, 16
        $region48: #{tpu_custom_call.1} parent=43 // pred_fallthru
          _
      $region44: #{tpu_custom_call.1} parent=5 // pred_fallthru
        _
    $region6: #{tpu_custom_call.1} parent=1 // loop_footer
      %s15 = sadd.s32 1, %s11
    $region7: #{tpu_custom_call.1} parent=1 // loop_footer_branch
      %10 = sbr.rel target = $region3
    $region8: #{tpu_custom_call.1} parent=1 // loop_exit
      _
    %295 = vsyncpa [#allocation6], 1
    %s296 = scalar_lea.sflag [#allocation6], 1
    %297 = vsyncpa %s296, 1

</llo_original>
